<compile_context>
chip_gen: v7x
topology: tpu7x:2x2x1
jax: 0.10.0
libtpu: 0.0.40
codegen_flags: <defaults>
</compile_context>

<pallas_src>
import jax
import jax.numpy as jnp
from jax.experimental import pallas as pl
from jax.experimental.pallas import tpu as pltpu


def _pool_and_inject_kernel(x_ref, o_ref):
    # x_ref / o_ref: (TR, WH) logical tile; one row == one (n, c) image plane.
    x = x_ref[...]
    m = jnp.max(x, axis=-1, keepdims=True)        # global spatial max (XLU)
    m = jnp.maximum(m, jnp.zeros_like(m))         # relu(maxpool)
    o_ref[...] = x + m                            # broadcast-add over spatial


def _round_up(v: int, m: int) -> int:
    return -(-v // m) * m


def pool_and_inject(x_nchw: jax.Array) -> jax.Array:
    """x_nchw: (N, C, W, H) array -> same shape."""
    N, C, W, H = x_nchw.shape
    rows = N * C
    wh = W * H
    dtype = x_nchw.dtype
    itemsize = jnp.dtype(dtype).itemsize

    x2d = x_nchw.reshape(rows, wh)

    # Row-tile selection:
    #  - multiple of the sublane packing (8 for f32, 16 for bf16, ...)
    #  - ~2 MiB per block: pipelines well and fits the default scoped VMEM on
    #    every generation (v5e 16 MiB, v6e/v7x 32 MiB) with double buffering.
    sublane = max(8, 32 // itemsize)
    wh_phys = _round_up(wh, 128)                  # physical lane footprint
    target_block_bytes = 2 * 1024 * 1024
    tr = (target_block_bytes // (wh_phys * itemsize)) // sublane * sublane
    tr = max(sublane, tr)
    tr = min(tr, _round_up(rows, sublane))

    # v7x megacore: make sure the "parallel" grid has >= 4 steps when there
    # are enough rows, so both TensorCores stream (per-step cost ~0.35 us).
    min_steps = 4
    if rows >= min_steps * sublane:
        tr_cap = max(sublane, (rows // min_steps) // sublane * sublane)
        tr = min(tr, tr_cap)

    grid = (pl.cdiv(rows, tr),)

    # Scoped-VMEM guard: in + out specs, double-buffered, physical lane width.
    block_bytes = tr * wh_phys * itemsize
    needed = 4 * block_bytes + (1 << 20)          # 2 bufs x (in+out) + margin
    vmem_limit = None
    if needed > 16 * 1024 * 1024:                 # only raise past the v5e default
        vmem_limit = min(100 * 1024 * 1024, needed)

    compiler_params = pltpu.CompilerParams(
        dimension_semantics=("parallel",),
        vmem_limit_bytes=vmem_limit,
    )

    cost = pl.CostEstimate(
        flops=2 * rows * wh,                      # max-reduce + add, roughly
        transcendentals=0,
        bytes_accessed=2 * rows * wh * itemsize,  # one read + one write pass
    )

    out2d = pl.pallas_call(
        _pool_and_inject_kernel,
        out_shape=jax.ShapeDtypeStruct((rows, wh), dtype),
        grid=grid,
        in_specs=[pl.BlockSpec((tr, wh), lambda i: (i, 0))],
        out_specs=pl.BlockSpec((tr, wh), lambda i: (i, 0)),
        compiler_params=compiler_params,
        cost_estimate=cost,
    )(x2d)

    return out2d.reshape(N, C, W, H)


def _reference(x_nchw: jax.Array) -> jax.Array:
    # Pure-JAX reference mirroring the PyTorch forward.
    pooled = jnp.max(x_nchw, axis=(2, 3), keepdims=True)   # MaxPool2d((W, H))
    pooled = jax.nn.relu(pooled)
    return pooled + x_nchw                                  # repeat == broadcast


if __name__ == "__main__":
    key = jax.random.PRNGKey(0)

    # Small shape consistent with the module (input spatial must equal (W, H)).
    N, C, W, H = 2, 4, 16, 16
    x = jax.random.normal(key, (N, C, W, H), dtype=jnp.float32)
    out = jax.block_until_ready(pool_and_inject(x))
    ref = _reference(x)
    assert out.shape == (N, C, W, H)
    assert jnp.allclose(out, ref, atol=1e-6, rtol=1e-6), "mismatch vs reference"

    # Non-128-aligned spatial size: exercises the in-kernel ragged-lane path
    # (no host pad / slice anymore).
    W2, H2 = 15, 19
    x2 = jax.random.normal(jax.random.PRNGKey(1), (N, C, W2, H2), dtype=jnp.float32)
    out2 = jax.block_until_ready(pool_and_inject(x2))
    assert jnp.allclose(out2, _reference(x2), atol=1e-6, rtol=1e-6), "mismatch (ragged lanes)"

    # Larger row count: exercises multi-step grid + partial last row-block.
    N3, C3 = 6, 22   # rows = 132, not a multiple of the row tile
    x3 = jax.random.normal(jax.random.PRNGKey(2), (N3, C3, W2, H2), dtype=jnp.float32)
    out3 = jax.block_until_ready(pool_and_inject(x3))
    assert jnp.allclose(out3, _reference(x3), atol=1e-6, rtol=1e-6), "mismatch (multi-step grid)"

    print("KERNEL_OK")
</pallas_src>

<mosaic_0001>
module attributes {stable_mosaic.version = 11 : i64} {
  func.func @_pool_and_inject_kernel(%arg0: i32, %arg1: memref<8x256xf32, #tpu.memory_space<vmem>>, %arg2: memref<8x256xf32, #tpu.memory_space<vmem>>) attributes {dimension_semantics = [#tpu.dimension_semantics<parallel>], iteration_bounds = array<i64: 1>, scalar_prefetch = 0 : i64, scratch_operands = 0 : i64, tpu.core_type = #tpu.core_type<tc>, window_params = [{transform_indices = @transform_0, window_bounds = array<i64: 8, 256>}, {transform_indices = @transform_1, window_bounds = array<i64: 8, 256>}]} {
    %c0 = arith.constant 0 : index
    %c0_0 = arith.constant 0 : index
    %0 = vector.load %arg1[%c0, %c0_0] : memref<8x256xf32, #tpu.memory_space<vmem>>, vector<8x256xf32>
    %cst = arith.constant dense<0xFF800000> : vector<8xf32>
    %1 = vector.multi_reduction <maximumf>, %0, %cst [1] : vector<8x256xf32> to vector<8xf32>
    %2 = vector.shape_cast %1 : vector<8xf32> to vector<8x1xf32>
    %cst_1 = arith.constant 0.000000e+00 : f32
    %3 = vector.broadcast %cst_1 : f32 to vector<8x1xf32>
    %4 = arith.maximumf %2, %3 : vector<8x1xf32>
    %5 = vector.broadcast %4 : vector<8x1xf32> to vector<8x256xf32>
    %6 = arith.addf %0, %5 : vector<8x256xf32>
    %c0_2 = arith.constant 0 : index
    %c0_3 = arith.constant 0 : index
    %7 = vector.load %arg2[%c0_2, %c0_3] : memref<8x256xf32, #tpu.memory_space<vmem>>, vector<8x256xf32>
    tpu.vector_store %arg2[%c0_2, %c0_3], %6 {strides = array<i32>} : memref<8x256xf32, #tpu.memory_space<vmem>>, vector<8x256xf32>,
    return
  }
  func.func @transform_0(%arg0: i32) -> (i32, i32) {
    %c0_i32 = arith.constant 0 : i32
    %c0_i32_0 = arith.constant 0 : i32
    return %arg0, %c0_i32 : i32, i32
  }
  func.func @transform_1(%arg0: i32) -> (i32, i32) {
    %c0_i32 = arith.constant 0 : i32
    %c0_i32_0 = arith.constant 0 : i32
    return %arg0, %c0_i32 : i32, i32
  }
}

</mosaic_0001>

<llo_original>
// kernel: tpu_custom_call.1
$region0: #{tpu_custom_call.1}
  #allocation0 [shape = 'u32[]', space=smem, size = 0x4, offset = 0x4, fixed_abs, tag = 'smem constant byte address 0x4 - core index']
  #allocation1 [shape = 'u32[144,128]{1,0:T(1,128)}', space=vmem, size = 0x12000, scoped, tag = 'internal scratch']
  %s0 = inlined_call_operand.hbm [shape: f32[8,256], index: 0, kind: input, shape index: {}]
  %s1 = inlined_call_operand.hbm [shape: f32[8,256], index: 1, kind: output, shape index: {}]
  %s2 = sld [smem:[#allocation0]]
  $region18: #{tpu_custom_call.1} parent=0
    _
  %s4 = ssub.s32 1, %s2
  %s5 = scalar_select 0, %s4, %s2
  $region1: #{tpu_custom_call.1} parent=0
    #allocation2 [shape = 'u8[8192]{0}', space=vmem, size = 0x2000, scoped, tag = 'input window, operand 0, single buffered']
    #allocation3 [shape = 's32[1]{0}', space=sflag, size = 0x4, scoped, tag = 'scoped memory for tpu_custom_call.1']
    #allocation4 [shape = 's32[1]{0}', space=sflag, size = 0x4, scoped, tag = 'scoped memory for tpu_custom_call.1']
    #allocation5 [shape = 'u8[8192]{0}', space=vmem, size = 0x2000, scoped, tag = 'output window, operand 0, single buffered']
    %6 = vsyncpa [#allocation3], 0
    %7 = vsyncpa [#allocation4], 0
    // Predicated region
    $region2: #{tpu_custom_call.1} parent=1 // pred_check
      _
    $region3: #{tpu_custom_call.1} parent=1 // pred_check_branch
      %9 = sbr.rel (0) target = $region5
    $region4: #{tpu_custom_call.1} parent=1 // pred_region
      %s11 = ssub.s32 256, 256
      %12 = vsyncadd [#allocation3], %s11
      %s14 = sshll.u32 [#allocation2], 4
      %s15 = int_to_ptr.vmem [resolvable:$true] %s14
      %17 = dma.hbm_to_vmem [thread:$0]  %s0, 256, %s15, [#allocation3]
    $region5: #{tpu_custom_call.1} parent=1 // pred_fallthru
      _
    // Predicated region
    $region6: #{tpu_custom_call.1} parent=1 // pred_check
      _
    $region7: #{tpu_custom_call.1} parent=1 // pred_check_branch
      %19 = sbr.rel (0) target = $region9
    $region8: #{tpu_custom_call.1} parent=1 // pred_region
      %20 = dma.done [#allocation3], 256
    $region9: #{tpu_custom_call.1} parent=1 // pred_fallthru
      _
    %v21 = vld [vmem:[#allocation2] sm:$0xff]
    %v22 = vld [vmem:[#allocation2 + $0x8] sm:$0xff]
    %v23 = vmax.f32 %v21, %v22
    %24 = vmax.xlane.f32.xlu0 %v23
    %v25 = vpop.xlane.xlu0 %24
    %v26 = vmax.f32 %v25, 0.0
    %v27 = vadd.f32 %v21, %v26
    %v28 = vadd.f32 %v22, %v26
    %29 = vst [vmem:[#allocation5] sm:$0xff] %v27
    %30 = vst [vmem:[#allocation5 + $0x8] sm:$0xff] %v28
    // Predicated region
    $region10: #{tpu_custom_call.1} parent=1 // pred_check
      _
    $region11: #{tpu_custom_call.1} parent=1 // pred_check_branch
      %32 = sbr.rel (0) target = $region13
    $region12: #{tpu_custom_call.1} parent=1 // pred_region
      %s34 = ssub.s32 256, 256
      %35 = vsyncadd [#allocation4], %s34
      %s37 = sshll.u32 [#allocation5], 4
      %s38 = int_to_ptr.vmem [resolvable:$true] %s37
      %40 = dma.vmem_to_hbm [thread:$0]  %s38, 256, %s1, [#allocation4]
    $region13: #{tpu_custom_call.1} parent=1 // pred_fallthru
      _
    // Predicated region
    $region14: #{tpu_custom_call.1} parent=1 // pred_check
      _
    $region15: #{tpu_custom_call.1} parent=1 // pred_check_branch
      %42 = sbr.rel (0) target = $region17
    $region16: #{tpu_custom_call.1} parent=1 // pred_region
      %43 = dma.done [#allocation4], 256
    $region17: #{tpu_custom_call.1} parent=1 // pred_fallthru
      _
    %44 = vsyncpa [#allocation3], 1
    %45 = vsyncpa [#allocation4], 1

</llo_original>
